<compile_context>
chip_gen: v7x
topology: tpu7x:2x2x1
jax: 0.10.0
libtpu: 0.0.40
codegen_flags: <defaults>
</compile_context>

<pallas_src>
import functools

import jax
import jax.numpy as jnp
from jax.experimental import pallas as pl
from jax.experimental.pallas import tpu as pltpu


# ----------------------------- hyper-params ---------------------------------
TEXT_DIM = 16
AUDIO_DIM = 12
SPKR_EMB_DIM = 4
IN_CHANNELS = TEXT_DIM + AUDIO_DIM + SPKR_EMB_DIM   # 32
OUT_CHANNELS = 16
HIDDEN_DIM = 32
OUTPUT_DIM = 2          # >1  -> softmax path of the reference forward
KSIZE = 3               # params.kernel_size (conv1 and conv2)
CONV2_STRIDE = 2        # conv2 = nn.Conv1d(..., stride=2)  (num_layers == 2)
NUM_EMBEDDINGS = 50
NUM_SPEAKERS = 5
PADDING_IDX = 0
DROPOUT_P = 0.2         # TODO(synk): F.dropout(training=True) is stochastic in the
                        # reference forward; implemented as identity (eval-style).

BATCH = 2
SEQ = 16

NEG_SLOPE = 0.01        # F.leaky_relu default
LANE = 128              # lane padding for all matmul N dims
BATCH_TILE = 8          # utterances per grid step (output tile = full (8,128))

# packed weight slab row offsets (all multiples of 16 -> aligned bf16 slices)
_KC = KSIZE * IN_CHANNELS                 # 48  conv1 K
W_ROWS = _KC + OUT_CHANNELS + OUT_CHANNELS + HIDDEN_DIM   # 112


# ------------------------------ Pallas kernel --------------------------------
def _utt_cnn_kernel(xcol_ref, w_ref, b_ref, o_ref, *, bt, l1, l1p, out_dim):
    """One batch tile (bt utterances) per grid step.

    xcol_ref : (bt*l1p, 128) bf16  im2col'd conv1 LHS (cols >= 3*C_in are zero;
               rows l1..l1p-1 of each utterance are zero padding)
    w_ref    : (112, 128)    bf16  [conv1(48) | conv2 fused taps(16) | fc1(16) | fc2(32)]
    b_ref    : (8, 128)      f32   rows: b1, b2, fb1, fb2 (zero padded)
    o_ref    : (bt, 128)     f32   softmax probs in cols 0:out_dim, zeros elsewhere
    """
    m = bt * l1p
    oc = OUT_CHANNELS
    kc = KSIZE * IN_CHANNELS

    def leaky(v):
        return jnp.where(v > 0, v, NEG_SLOPE * v)

    biases = b_ref[...]                                   # (8, 128) f32

    # ---- conv1: one (m, 48) x (48, 128) MXU matmul (bf16 in, f32 acc) -------
    w1 = w_ref[0:kc, :]
    h1 = leaky(jnp.dot(xcol_ref[:, :kc], w1, preferred_element_type=jnp.float32)
               + biases[0:1, :])                          # (m, 128) f32; lanes>=oc are 0

    # ---- conv2 (k=KSIZE, stride=CONV2_STRIDE), taps fused into ONE matmul ---
    # RHS has tap j at lane block j*oc:(j+1)*oc, so
    #   r[t, j*oc + c] = tap_j(h1[t])[c].
    # conv2_stride1[t, c] = sum_j r[t+j, j*oc + c]; taps are re-aligned with
    # XLU rolls (sublane roll by -j, lane roll by -j*oc) instead of unaligned
    # LHS slices.  Lanes >= oc of `acc` hold finite garbage and are never used.
    w2 = w_ref[kc:kc + oc, :]
    r = jnp.dot(h1[:, :oc].astype(jnp.bfloat16), w2,
                preferred_element_type=jnp.float32)       # (m, 128)
    acc = r
    for j in range(1, KSIZE):                             # static, tiny
        rj = pltpu.roll(r, shift=(m - j) % m, axis=0)
        rj = pltpu.roll(rj, shift=(LANE - oc * j) % LANE, axis=1)
        acc = acc + rj
    c2 = leaky(acc + biases[1:2, :])                      # (m, 128)

    # ---- max_pool1d over the full conv2 output length, per utterance --------
    # Valid stride-2 positions: t even and t <= l1 - KSIZE.  Batch-aligned
    # layout (l1p multiple of 8) -> one masked reduce, no unaligned slices.
    c2_3d = c2.reshape(bt, l1p, LANE)
    tpos = jax.lax.broadcasted_iota(jnp.int32, (bt, l1p, LANE), 1)
    valid = (tpos <= l1 - KSIZE) & ((tpos % CONV2_STRIDE) == 0)
    feats = jnp.max(jnp.where(valid, c2_3d, -jnp.inf), axis=1)   # (bt, 128)

    # ---- fc1 -> tanh -> fc2  (dropout == identity, see TODO above) ----------
    wf1 = w_ref[kc + oc:kc + 2 * oc, :]
    g1 = jnp.tanh(jnp.dot(feats[:, :oc].astype(jnp.bfloat16), wf1,
                          preferred_element_type=jnp.float32) + biases[2:3, :])

    wf2 = w_ref[kc + 2 * oc:kc + 2 * oc + HIDDEN_DIM, :]
    logits = (jnp.dot(g1[:, :HIDDEN_DIM].astype(jnp.bfloat16), wf2,
                      preferred_element_type=jnp.float32) + biases[3:4, :])

    # ---- softmax over the real output columns (F.softmax, dim=1) ------------
    col = jax.lax.broadcasted_iota(jnp.int32, (bt, LANE), 1)
    logits = jnp.where(col < out_dim, logits, -jnp.inf)
    mmax = jnp.max(logits, axis=-1, keepdims=True)
    e = jnp.exp(logits - mmax)
    o_ref[...] = e / jnp.sum(e, axis=-1, keepdims=True)


# ------------------------------ wrapper ---------------------------------------
def utt_bimodal_cnn_forward(acoustic, text_ids, speaker_ids, params):
    word_emb, spkr_emb, packed_w, packed_b = params

    # Glue (plain JAX): embedding lookups (max_norm=1.0) + modality concat.
    embs = _embed_max_norm(word_emb, text_ids)            # (B, S, text_dim)
    spk_embs = _embed_max_norm(spkr_emb, speaker_ids)     # (B, S, spkr_dim)
    x = jnp.concatenate((acoustic, embs, spk_embs), axis=2)   # (B, S, C_in)
    B, S, C = x.shape
    L1 = S - KSIZE + 1
    L1P = ((L1 + 7) // 8) * 8                             # per-utterance sublane-aligned
    BP = ((B + BATCH_TILE - 1) // BATCH_TILE) * BATCH_TILE

    # im2col for conv1, batch-aligned (layout plumbing -> lane-dense MXU matmul).
    x = jnp.pad(x, ((0, BP - B), (0, 0), (0, 0)))
    xcol = jnp.concatenate([x[:, j:j + L1, :] for j in range(KSIZE)], axis=-1)
    xcol = jnp.pad(xcol, ((0, 0), (0, L1P - L1), (0, LANE - KSIZE * C)))
    xcol = xcol.reshape(BP * L1P, LANE).astype(jnp.bfloat16)

    kernel = functools.partial(_utt_cnn_kernel, bt=BATCH_TILE, l1=L1, l1p=L1P,
                               out_dim=OUTPUT_DIM)

    m_total = BP * L1P
    flops = int(2 * m_total * (KSIZE * C) * OUT_CHANNELS
                + 2 * m_total * OUT_CHANNELS * (KSIZE * OUT_CHANNELS)
                + 2 * BP * OUT_CHANNELS * HIDDEN_DIM
                + 2 * BP * HIDDEN_DIM * OUTPUT_DIM)
    bytes_accessed = int(xcol.size * 2 + packed_w.size * 2 + packed_b.size * 4
                         + BP * LANE * 4)
    cost = pl.CostEstimate(flops=flops,
                           transcendentals=int(BP * (HIDDEN_DIM + LANE)),
                           bytes_accessed=bytes_accessed)

    out_pad = pl.pallas_call(
        kernel,
        out_shape=jax.ShapeDtypeStruct((BP, LANE), jnp.float32),
        grid=(BP // BATCH_TILE,),                          # batch tiles
        in_specs=[
            pl.BlockSpec((BATCH_TILE * L1P, LANE), lambda i: (i, 0)),
            pl.BlockSpec(packed_w.shape, lambda i: (0, 0)),   # resident weights
            pl.BlockSpec(packed_b.shape, lambda i: (0, 0)),   # resident biases
        ],
        out_specs=pl.BlockSpec((BATCH_TILE, LANE), lambda i: (i, 0)),
        compiler_params=pltpu.CompilerParams(
            dimension_semantics=("parallel",)),            # megacore at larger batch
        cost_estimate=cost,
    )(xcol, packed_w, packed_b)

    return out_pad[:B, :OUTPUT_DIM]                        # (B, output_dim)


# ------------------------------ parameters ------------------------------------
def _pack_params(w1, b1, w2, b2, fw1, fb1, fw2, fb2):
    """Tightly pack conv/fc weights: (112, 128) bf16 slab + (8, 128) f32 bias slab."""
    def pad_n(mat):          # pad only the N (lane) dim to 128
        return jnp.pad(mat, ((0, 0), (0, LANE - mat.shape[1])))

    # conv1: torch (OC, C_in, k) -> (k*C_in, OC), matching the im2col column order.
    w1_col = jnp.transpose(w1, (2, 1, 0)).reshape(KSIZE * IN_CHANNELS, OUT_CHANNELS)
    # conv2 fused taps: torch (OC, IC, k) -> (IC, k*OC), tap j at cols j*OC:(j+1)*OC.
    w2_all = jnp.transpose(w2, (1, 2, 0)).reshape(OUT_CHANNELS, KSIZE * OUT_CHANNELS)
    packed_w = jnp.concatenate(
        [pad_n(w1_col), pad_n(w2_all),
         pad_n(jnp.transpose(fw1)), pad_n(jnp.transpose(fw2))],
        axis=0).astype(jnp.bfloat16)                       # (112, 128)

    def pad_row(v):
        return jnp.pad(v.reshape(1, -1), ((0, 0), (0, LANE - v.shape[0])))

    packed_b = jnp.concatenate(
        [pad_row(b1), pad_row(b2), pad_row(fb1), pad_row(fb2),
         jnp.zeros((4, LANE), jnp.float32)], axis=0)       # (8, 128) f32
    return packed_w, packed_b


def _init_params(key):
    ks = jax.random.split(key, 10)

    def uni(k, shape, fan_in):
        bound = 1.0 / jnp.sqrt(float(fan_in))
        return jax.random.uniform(k, shape, jnp.float32, -bound, bound)

    # Embedding tables (max_norm=1.0 applied at lookup; padding row zeroed).
    word_emb = jax.random.normal(ks[0], (NUM_EMBEDDINGS, TEXT_DIM), jnp.float32)
    word_emb = word_emb.at[PADDING_IDX].set(0.0)
    spkr_emb = jax.random.normal(ks[1], (NUM_SPEAKERS, SPKR_EMB_DIM), jnp.float32)

    # torch-layout weights (Conv1d: (OC, IC, k); Linear: (out, in)).
    w1 = uni(ks[2], (OUT_CHANNELS, IN_CHANNELS, KSIZE), IN_CHANNELS * KSIZE)
    b1 = uni(ks[3], (OUT_CHANNELS,), IN_CHANNELS * KSIZE)
    w2 = uni(ks[4], (OUT_CHANNELS, OUT_CHANNELS, KSIZE), OUT_CHANNELS * KSIZE)
    b2 = uni(ks[5], (OUT_CHANNELS,), OUT_CHANNELS * KSIZE)
    fw1 = uni(ks[6], (HIDDEN_DIM, OUT_CHANNELS), OUT_CHANNELS)
    fb1 = uni(ks[7], (HIDDEN_DIM,), OUT_CHANNELS)
    fw2 = uni(ks[8], (OUTPUT_DIM, HIDDEN_DIM), HIDDEN_DIM)
    fb2 = uni(ks[9], (OUTPUT_DIM,), HIDDEN_DIM)

    packed_w, packed_b = _pack_params(w1, b1, w2, b2, fw1, fb1, fw2, fb2)
    raw = (word_emb, spkr_emb, w1, b1, w2, b2, fw1, fb1, fw2, fb2)
    packed = (word_emb, spkr_emb, packed_w, packed_b)
    return raw, packed


def _embed_max_norm(table, ids, max_norm=1.0):
    """nn.Embedding(..., max_norm=1.0) lookup semantics (non-mutating)."""
    # TODO(synk): torch renormalizes the embedding weight rows in place at lookup;
    # here the renorm is applied only to the gathered rows.
    rows = jnp.take(table, ids, axis=0)
    norms = jnp.linalg.norm(rows, axis=-1, keepdims=True)
    scale = jnp.where(norms > max_norm, max_norm / (norms + 1e-7), 1.0)
    return rows * scale


# ------------------------- pure-JAX reference (f32) ---------------------------
def _reference_forward(acoustic, text_ids, speaker_ids, raw):
    (word_emb, spkr_emb, w1, b1, w2, b2, fw1, fb1, fw2, fb2) = raw
    embs = _embed_max_norm(word_emb, text_ids)
    spk = _embed_max_norm(spkr_emb, speaker_ids)
    x = jnp.transpose(jnp.concatenate((acoustic, embs, spk), axis=2), (0, 2, 1))

    def leaky(v):
        return jnp.where(v > 0, v, NEG_SLOPE * v)

    dn = ("NCH", "OIH", "NCH")
    h1 = jax.lax.conv_general_dilated(x, w1, (1,), "VALID", dimension_numbers=dn)
    h1 = leaky(h1 + b1[None, :, None])
    h2 = jax.lax.conv_general_dilated(h1, w2, (CONV2_STRIDE,), "VALID",
                                      dimension_numbers=dn)
    h2 = leaky(h2 + b2[None, :, None])
    feats = jnp.max(h2, axis=2)                      # max_pool1d over full length
    g1 = jnp.tanh(feats @ fw1.T + fb1)               # dropout == identity
    logits = g1 @ fw2.T + fb2
    return jax.nn.softmax(logits, axis=1)


# ----------------------------------- main --------------------------------------
if __name__ == "__main__":
    key = jax.random.PRNGKey(0)
    k_param, k_ac, k_txt, k_spk = jax.random.split(key, 4)

    raw_params, packed_params = _init_params(k_param)

    acoustic_input = jax.random.normal(k_ac, (BATCH, SEQ, AUDIO_DIM), jnp.float32)
    text_input = jax.random.randint(k_txt, (BATCH, SEQ), 0, NUM_EMBEDDINGS)
    speaker_input = jax.random.randint(k_spk, (BATCH, SEQ), 0, NUM_SPEAKERS)

    out = utt_bimodal_cnn_forward(acoustic_input, text_input, speaker_input,
                                  packed_params)
    out = jax.block_until_ready(out)

    ref = _reference_forward(acoustic_input, text_input, speaker_input, raw_params)

    assert out.shape == (BATCH, OUTPUT_DIM)
    assert bool(jnp.all(jnp.isfinite(out)))
    assert bool(jnp.all((out >= 0.0) & (out <= 1.0)))
    assert bool(jnp.allclose(jnp.sum(out, axis=-1), 1.0, atol=1e-4))
    # bf16 weight/activation feed vs f32 reference -> loose tolerance.
    assert bool(jnp.allclose(out, ref, atol=5e-2)), (out, ref)
    print("KERNEL_OK")
</pallas_src>

<mosaic_0001>
module attributes {stable_mosaic.version = 11 : i64} {
  func.func @_utt_cnn_kernel(%arg0: i32, %arg1: memref<128x128xbf16, #tpu.memory_space<vmem>>, %arg2: memref<160x128xbf16, #tpu.memory_space<vmem>>, %arg3: memref<8x128xf32, #tpu.memory_space<vmem>>, %arg4: memref<8x128xf32, #tpu.memory_space<vmem>>) attributes {dimension_semantics = [#tpu.dimension_semantics<parallel>], iteration_bounds = array<i64: 1>, scalar_prefetch = 0 : i64, scratch_operands = 0 : i64, tpu.core_type = #tpu.core_type<tc>, window_params = [{transform_indices = @transform_0, window_bounds = array<i64: 128, 128>}, {pipeline_mode = #tpu.pipeline_mode<synchronous>, transform_indices = @transform_1, window_bounds = array<i64: 160, 128>}, {pipeline_mode = #tpu.pipeline_mode<synchronous>, transform_indices = @transform_2, window_bounds = array<i64: 8, 128>}, {transform_indices = @transform_3, window_bounds = array<i64: 8, 128>}]} {
    %c0 = arith.constant 0 : index
    %c0_0 = arith.constant 0 : index
    %0 = vector.load %arg3[%c0, %c0_0] : memref<8x128xf32, #tpu.memory_space<vmem>>, vector<8x128xf32>
    %c0_1 = arith.constant 0 : index
    %c0_2 = arith.constant 0 : index
    %1 = vector.load %arg2[%c0_1, %c0_2] : memref<160x128xbf16, #tpu.memory_space<vmem>>, vector<96x128xbf16>
    %c0_3 = arith.constant 0 : index
    %c0_4 = arith.constant 0 : index
    %2 = vector.load %arg1[%c0_3, %c0_4] : memref<128x128xbf16, #tpu.memory_space<vmem>>, vector<128x96xbf16>
    %cst = arith.constant dense<0.000000e+00> : vector<128x128xf32>
    %3 = tpu.matmul %2, %1, %cst {dimension_numbers = #tpu.dot_dimension_numbers<[1], [0], [0], [1], [0, 0, 1, 1], [], []>} : vector<128x96xbf16>, vector<96x128xbf16>, vector<128x128xf32> -> vector<128x128xf32>
    %4 = vector.extract_strided_slice %0 {offsets = [0, 0], sizes = [1, 128], strides = [1, 1]} : vector<8x128xf32> to vector<1x128xf32>
    %5 = vector.broadcast %4 : vector<1x128xf32> to vector<128x128xf32>
    %6 = arith.addf %3, %5 : vector<128x128xf32>
    %cst_5 = arith.constant 0.000000e+00 : f32
    %7 = vector.broadcast %cst_5 : f32 to vector<128x128xf32>
    %8 = arith.cmpf ogt, %6, %7 : vector<128x128xf32>
    %cst_6 = arith.constant 0.00999999977 : f32
    %9 = vector.broadcast %cst_6 : f32 to vector<128x128xf32>
    %10 = arith.mulf %9, %6 : vector<128x128xf32>
    %11 = arith.select %8, %6, %10 : vector<128x128xi1>, vector<128x128xf32>
    %c96 = arith.constant 96 : index
    %c0_7 = arith.constant 0 : index
    %12 = vector.load %arg2[%c96, %c0_7] : memref<160x128xbf16, #tpu.memory_space<vmem>>, vector<16x128xbf16>
    %13 = vector.extract_strided_slice %11 {offsets = [0, 0], sizes = [128, 16], strides = [1, 1]} : vector<128x128xf32> to vector<128x16xf32>
    %14 = arith.truncf %13 : vector<128x16xf32> to vector<128x16xbf16>
    %cst_8 = arith.constant dense<0.000000e+00> : vector<128x128xf32>
    %15 = tpu.matmul %14, %12, %cst_8 {dimension_numbers = #tpu.dot_dimension_numbers<[1], [0], [0], [1], [0, 0, 1, 1], [], []>} : vector<128x16xbf16>, vector<16x128xbf16>, vector<128x128xf32> -> vector<128x128xf32>
    %c127_i32 = arith.constant 127 : i32
    %16 = tpu.dynamic_rotate %15 by %c127_i32 dim 0 : vector<128x128xf32>, i32 -> vector<128x128xf32>
    %c112_i32 = arith.constant 112 : i32
    %17 = tpu.dynamic_rotate %16 by %c112_i32 dim 1 : vector<128x128xf32>, i32 -> vector<128x128xf32>
    %18 = arith.addf %15, %17 : vector<128x128xf32>
    %c126_i32 = arith.constant 126 : i32
    %19 = tpu.dynamic_rotate %15 by %c126_i32 dim 0 : vector<128x128xf32>, i32 -> vector<128x128xf32>
    %c96_i32 = arith.constant 96 : i32
    %20 = tpu.dynamic_rotate %19 by %c96_i32 dim 1 : vector<128x128xf32>, i32 -> vector<128x128xf32>
    %21 = arith.addf %18, %20 : vector<128x128xf32>
    %22 = vector.extract_strided_slice %0 {offsets = [1, 0], sizes = [1, 128], strides = [1, 1]} : vector<8x128xf32> to vector<1x128xf32>
    %23 = vector.broadcast %22 : vector<1x128xf32> to vector<128x128xf32>
    %24 = arith.addf %21, %23 : vector<128x128xf32>
    %cst_9 = arith.constant 0.000000e+00 : f32
    %25 = vector.broadcast %cst_9 : f32 to vector<128x128xf32>
    %26 = arith.cmpf ogt, %24, %25 : vector<128x128xf32>
    %cst_10 = arith.constant 0.00999999977 : f32
    %27 = vector.broadcast %cst_10 : f32 to vector<128x128xf32>
    %28 = arith.mulf %27, %24 : vector<128x128xf32>
    %29 = arith.select %26, %24, %28 : vector<128x128xi1>, vector<128x128xf32>
    %30 = vector.shape_cast %29 : vector<128x128xf32> to vector<8x16x128xf32>
    %31 = tpu.iota {dimensions = array<i32: 1>} : vector<8x16x128xi32>
    %c11_i32 = arith.constant 11 : i32
    %32 = vector.broadcast %c11_i32 : i32 to vector<8x16x128xi32>
    %33 = arith.cmpi sle, %31, %32 : vector<8x16x128xi32>
    %c2_i32 = arith.constant 2 : i32
    %c0_i32 = arith.constant 0 : i32
    %34 = arith.cmpi eq, %c2_i32, %c0_i32 : i32
    %c1_i32 = arith.constant 1 : i32
    %35 = arith.select %34, %c1_i32, %c2_i32 : i32
    %36 = vector.broadcast %35 : i32 to vector<8x16x128xi32>
    %37 = arith.remsi %31, %36 : vector<8x16x128xi32>
    %c0_i32_11 = arith.constant 0 : i32
    %38 = vector.broadcast %c0_i32_11 : i32 to vector<8x16x128xi32>
    %39 = arith.cmpi ne, %37, %38 : vector<8x16x128xi32>
    %c0_i32_12 = arith.constant 0 : i32
    %40 = vector.broadcast %c0_i32_12 : i32 to vector<8x16x128xi32>
    %41 = arith.cmpi slt, %37, %40 : vector<8x16x128xi32>
    %c0_i32_13 = arith.constant 0 : i32
    %42 = arith.cmpi slt, %35, %c0_i32_13 : i32
    %43 = vector.broadcast %42 : i1 to vector<8x16x128xi1>
    %44 = vector.broadcast %43 : vector<8x16x128xi1> to vector<8x16x128xi1>
    %45 = arith.xori %41, %44 : vector<8x16x128xi1>
    %46 = arith.andi %45, %39 : vector<8x16x128xi1>
    %47 = vector.broadcast %35 : i32 to vector<8x16x128xi32>
    %48 = arith.addi %37, %47 : vector<8x16x128xi32>
    %49 = arith.select %46, %48, %37 : vector<8x16x128xi1>, vector<8x16x128xi32>
    %c0_i32_14 = arith.constant 0 : i32
    %50 = vector.broadcast %c0_i32_14 : i32 to vector<8x16x128xi32>
    %51 = arith.cmpi eq, %49, %50 : vector<8x16x128xi32>
    %52 = arith.andi %33, %51 : vector<8x16x128xi1>
    %cst_15 = arith.constant 0xFF800000 : f32
    %53 = vector.broadcast %cst_15 : f32 to vector<8x16x128xf32>
    %54 = arith.select %52, %30, %53 : vector<8x16x128xi1>, vector<8x16x128xf32>
    %cst_16 = arith.constant dense<0xFF800000> : vector<8x128xf32>
    %55 = vector.multi_reduction <maximumf>, %54, %cst_16 [1] : vector<8x16x128xf32> to vector<8x128xf32>
    %c112 = arith.constant 112 : index
    %c0_17 = arith.constant 0 : index
    %56 = vector.load %arg2[%c112, %c0_17] : memref<160x128xbf16, #tpu.memory_space<vmem>>, vector<16x128xbf16>
    %57 = vector.extract_strided_slice %55 {offsets = [0, 0], sizes = [8, 16], strides = [1, 1]} : vector<8x128xf32> to vector<8x16xf32>
    %58 = arith.truncf %57 : vector<8x16xf32> to vector<8x16xbf16>
    %cst_18 = arith.constant dense<0.000000e+00> : vector<8x128xf32>
    %59 = tpu.matmul %58, %56, %cst_18 {dimension_numbers = #tpu.dot_dimension_numbers<[1], [0], [0], [1], [0, 0, 1, 1], [], []>} : vector<8x16xbf16>, vector<16x128xbf16>, vector<8x128xf32> -> vector<8x128xf32>
    %60 = vector.extract_strided_slice %0 {offsets = [2, 0], sizes = [1, 128], strides = [1, 1]} : vector<8x128xf32> to vector<1x128xf32>
    %61 = vector.broadcast %60 : vector<1x128xf32> to vector<8x128xf32>
    %62 = arith.addf %59, %61 : vector<8x128xf32>
    %63 = math.tanh %62 : vector<8x128xf32>
    %c128 = arith.constant 128 : index
    %c0_19 = arith.constant 0 : index
    %64 = vector.load %arg2[%c128, %c0_19] : memref<160x128xbf16, #tpu.memory_space<vmem>>, vector<32x128xbf16>
    %65 = vector.extract_strided_slice %63 {offsets = [0, 0], sizes = [8, 32], strides = [1, 1]} : vector<8x128xf32> to vector<8x32xf32>
    %66 = arith.truncf %65 : vector<8x32xf32> to vector<8x32xbf16>
    %cst_20 = arith.constant dense<0.000000e+00> : vector<8x128xf32>
    %67 = tpu.matmul %66, %64, %cst_20 {dimension_numbers = #tpu.dot_dimension_numbers<[1], [0], [0], [1], [0, 0, 1, 1], [], []>} : vector<8x32xbf16>, vector<32x128xbf16>, vector<8x128xf32> -> vector<8x128xf32>
    %68 = vector.extract_strided_slice %0 {offsets = [3, 0], sizes = [1, 128], strides = [1, 1]} : vector<8x128xf32> to vector<1x128xf32>
    %69 = vector.broadcast %68 : vector<1x128xf32> to vector<8x128xf32>
    %70 = arith.addf %67, %69 : vector<8x128xf32>
    %71 = tpu.iota {dimensions = array<i32: 1>} : vector<8x128xi32>
    %c2_i32_21 = arith.constant 2 : i32
    %72 = vector.broadcast %c2_i32_21 : i32 to vector<8x128xi32>
    %73 = arith.cmpi slt, %71, %72 : vector<8x128xi32>
    %cst_22 = arith.constant 0xFF800000 : f32
    %74 = vector.broadcast %cst_22 : f32 to vector<8x128xf32>
    %75 = arith.select %73, %70, %74 : vector<8x128xi1>, vector<8x128xf32>
    %cst_23 = arith.constant dense<0xFF800000> : vector<8xf32>
    %76 = vector.multi_reduction <maximumf>, %75, %cst_23 [1] : vector<8x128xf32> to vector<8xf32>
    %77 = vector.shape_cast %76 : vector<8xf32> to vector<8x1xf32>
    %78 = vector.broadcast %77 : vector<8x1xf32> to vector<8x128xf32>
    %79 = arith.subf %75, %78 : vector<8x128xf32>
    %80 = math.exp %79 : vector<8x128xf32>
    %cst_24 = arith.constant dense<0.000000e+00> : vector<8xf32>
    %81 = vector.multi_reduction <add>, %80, %cst_24 [1] : vector<8x128xf32> to vector<8xf32>
    %82 = vector.shape_cast %81 : vector<8xf32> to vector<8x1xf32>
    %83 = vector.broadcast %82 : vector<8x1xf32> to vector<8x128xf32>
    %84 = arith.divf %80, %83 : vector<8x128xf32>
    %c0_25 = arith.constant 0 : index
    %c0_26 = arith.constant 0 : index
    %85 = vector.load %arg4[%c0_25, %c0_26] : memref<8x128xf32, #tpu.memory_space<vmem>>, vector<8x128xf32>
    tpu.vector_store %arg4[%c0_25, %c0_26], %84 {strides = array<i32>} : memref<8x128xf32, #tpu.memory_space<vmem>>, vector<8x128xf32>,
    return
  }
  func.func @transform_0(%arg0: i32) -> (i32, i32) {
    %c0_i32 = arith.constant 0 : i32
    %c0_i32_0 = arith.constant 0 : i32
    return %arg0, %c0_i32 : i32, i32
  }
  func.func @transform_1(%arg0: i32) -> (i32, i32) {
    %c0_i32 = arith.constant 0 : i32
    %c0_i32_0 = arith.constant 0 : i32
    %c0_i32_1 = arith.constant 0 : i32
    return %c0_i32, %c0_i32_0 : i32, i32
  }
  func.func @transform_2(%arg0: i32) -> (i32, i32) {
    %c0_i32 = arith.constant 0 : i32
    %c0_i32_0 = arith.constant 0 : i32
    %c0_i32_1 = arith.constant 0 : i32
    return %c0_i32, %c0_i32_0 : i32, i32
  }
  func.func @transform_3(%arg0: i32) -> (i32, i32) {
    %c0_i32 = arith.constant 0 : i32
    %c0_i32_0 = arith.constant 0 : i32
    return %arg0, %c0_i32 : i32, i32
  }
}

</mosaic_0001>

<llo_original>
// kernel: tpu_custom_call.1
$region0: #{tpu_custom_call.1}
  #allocation0 [shape = 'u32[]', space=smem, size = 0x4, offset = 0x4, fixed_abs, tag = 'smem constant byte address 0x4 - core index']
  #allocation1 [shape = 'u32[144,128]{1,0:T(1,128)}', space=vmem, size = 0x12000, scoped, tag = 'internal scratch']
  %s0 = inlined_call_operand.hbm [shape: bf16[128,128], index: 0, kind: input, shape index: {}]
  %s1 = inlined_call_operand.hbm [shape: bf16[160,128], index: 1, kind: input, shape index: {}]
  %s2 = inlined_call_operand.hbm [shape: f32[8,128], index: 2, kind: input, shape index: {}]
  %s3 = inlined_call_operand.hbm [shape: f32[8,128], index: 3, kind: output, shape index: {}]
  %s4 = sld [smem:[#allocation0]]
  $region34: #{tpu_custom_call.1} parent=0
    _
  %s6 = ssub.s32 1, %s4
  %s7 = scalar_select 0, %s6, %s4
  $region1: #{tpu_custom_call.1} parent=0
    #allocation2 [shape = 'u8[32768]{0}', space=vmem, size = 0x8000, scoped, tag = 'input window, operand 0, single buffered']
    #allocation3 [shape = 's32[1]{0}', space=sflag, size = 0x4, scoped, tag = 'scoped memory for tpu_custom_call.1']
    #allocation4 [shape = 's32[1]{0}', space=sflag, size = 0x4, scoped, tag = 'scoped memory for tpu_custom_call.1']
    #allocation5 [shape = 'u8[40960]{0}', space=vmem, size = 0xa000, scoped, tag = 'input window, operand 1, single buffered']
    #allocation6 [shape = 's32[1]{0}', space=sflag, size = 0x4, scoped, tag = 'scoped memory for tpu_custom_call.1']
    #allocation7 [shape = 'u8[4096]{0}', space=vmem, size = 0x1000, scoped, tag = 'input window, operand 2, single buffered']
    #allocation8 [shape = 'u8[4096]{0}', space=vmem, size = 0x1000, scoped, tag = 'output window, operand 0, single buffered']
    %8 = vsyncpa [#allocation3], 0
    %9 = vsyncpa [#allocation6], 0
    %10 = vsyncpa [#allocation4], 0
    // Predicated region
    $region2: #{tpu_custom_call.1} parent=1 // pred_check
      _
    $region3: #{tpu_custom_call.1} parent=1 // pred_check_branch
      %12 = sbr.rel (0) target = $region5
    $region4: #{tpu_custom_call.1} parent=1 // pred_region
      %s14 = ssub.s32 1024, 1024
      %15 = vsyncadd [#allocation3], %s14
      %s16 = sshll.u32 [#allocation2], 4
      %s17 = int_to_ptr.vmem [resolvable:$true] %s16
      %22 = dma.hbm_to_vmem [thread:$0]  %s0, 1024, %s17, [#allocation3], 64, 64, 4
    $region5: #{tpu_custom_call.1} parent=1 // pred_fallthru
      _
    // Predicated region
    $region6: #{tpu_custom_call.1} parent=1 // pred_check
      _
    $region7: #{tpu_custom_call.1} parent=1 // pred_check_branch
      %24 = sbr.rel (0) target = $region9
    $region8: #{tpu_custom_call.1} parent=1 // pred_region
      %s26 = ssub.s32 1280, 1280
      %27 = vsyncadd [#allocation6], %s26
      %s28 = sshll.u32 [#allocation5], 4
      %s29 = int_to_ptr.vmem [resolvable:$true] %s28
      %34 = dma.hbm_to_vmem [thread:$0]  %s1, 1280, %s29, [#allocation6], 64, 64, 4
    $region9: #{tpu_custom_call.1} parent=1 // pred_fallthru
      _
    // Predicated region
    $region10: #{tpu_custom_call.1} parent=1 // pred_check
      _
    $region11: #{tpu_custom_call.1} parent=1 // pred_check_branch
      %36 = sbr.rel (0) target = $region13
    $region12: #{tpu_custom_call.1} parent=1 // pred_region
      %s38 = ssub.s32 128, 128
      %39 = vsyncadd [#allocation6], %s38
      %s41 = sshll.u32 [#allocation7], 4
      %s42 = int_to_ptr.vmem [resolvable:$true] %s41
      %44 = dma.hbm_to_vmem [thread:$0]  %s2, 128, %s42, [#allocation6]
    $region13: #{tpu_custom_call.1} parent=1 // pred_fallthru
      _
    // Predicated region
    $region14: #{tpu_custom_call.1} parent=1 // pred_check
      _
    $region15: #{tpu_custom_call.1} parent=1 // pred_check_branch
      %46 = sbr.rel (0) target = $region17
    $region16: #{tpu_custom_call.1} parent=1 // pred_region
      %47 = dma.done [#allocation3], 1024
    $region17: #{tpu_custom_call.1} parent=1 // pred_fallthru
      _
    // Predicated region
    $region18: #{tpu_custom_call.1} parent=1 // pred_check
      _
    $region19: #{tpu_custom_call.1} parent=1 // pred_check_branch
      %49 = sbr.rel (0) target = $region21
    $region20: #{tpu_custom_call.1} parent=1 // pred_region
      %50 = dma.done [#allocation6], 1280
    $region21: #{tpu_custom_call.1} parent=1 // pred_fallthru
      _
    // Predicated region
    $region22: #{tpu_custom_call.1} parent=1 // pred_check
      _
    $region23: #{tpu_custom_call.1} parent=1 // pred_check_branch
      %52 = sbr.rel (0) target = $region25
    $region24: #{tpu_custom_call.1} parent=1 // pred_region
      %53 = dma.done [#allocation6], 128
    $region25: #{tpu_custom_call.1} parent=1 // pred_fallthru
      _
    %v55 = vld [vmem:[#allocation7] sm:$0xff]
    %v56 = vld [vmem:[#allocation5] sm:$0xf]
    %v57 = vld [vmem:[#allocation5 + $0x4] sm:$0xf]
    %v58 = vld [vmem:[#allocation5 + $0x8] sm:$0xf]
    %v59 = vld [vmem:[#allocation5 + $0xc] sm:$0xf]
    %v60 = vld [vmem:[#allocation5 + $0x10] sm:$0xf]
    %v61 = vld [vmem:[#allocation5 + $0x14] sm:$0xf]
    %v62 = vld [vmem:[#allocation5 + $0x18] sm:$0xf]
    %v63 = vld [vmem:[#allocation5 + $0x1c] sm:$0xf]
    %v64 = vld [vmem:[#allocation5 + $0x20] sm:$0xf]
    %v65 = vld [vmem:[#allocation5 + $0x24] sm:$0xf]
    %v66 = vld [vmem:[#allocation5 + $0x28] sm:$0xf]
    %v67 = vld [vmem:[#allocation5 + $0x2c] sm:$0xf]
    %v68 = vld [vmem:[#allocation2] sm:$0xf]
    %v69 = vld [vmem:[#allocation2 + $0x4] sm:$0xf]
    %v70 = vld [vmem:[#allocation2 + $0x8] sm:$0xf]
    %v71 = vld [vmem:[#allocation2 + $0xc] sm:$0xf]
    %v72 = vld [vmem:[#allocation2 + $0x10] sm:$0xf]
    %v73 = vld [vmem:[#allocation2 + $0x14] sm:$0xf]
    %v74 = vld [vmem:[#allocation2 + $0x18] sm:$0xf]
    %v75 = vld [vmem:[#allocation2 + $0x1c] sm:$0xf]
    %v76 = vld [vmem:[#allocation2 + $0x20] sm:$0xf]
    %v77 = vld [vmem:[#allocation2 + $0x24] sm:$0xf]
    %v78 = vld [vmem:[#allocation2 + $0x28] sm:$0xf]
    %v79 = vld [vmem:[#allocation2 + $0x2c] sm:$0xf]
    %v80 = vld [vmem:[#allocation2 + $0x30] sm:$0xf]
    %v81 = vld [vmem:[#allocation2 + $0x34] sm:$0xf]
    %v82 = vld [vmem:[#allocation2 + $0x38] sm:$0xf]
    %v83 = vld [vmem:[#allocation2 + $0x3c] sm:$0xf]
    %v84 = vlaneseq
    %v85 = vshrl.u32 %v84, 7
    %v86 = vsub.s32 0, %v85
    %v87 = vrot.slane %v55, %v86
    %v104 = vunpack.c.l.b16 %v68
    %v105 = vunpack.c.l.b16 %v69
    %v106 = vunpack.c.l.b16 %v70
    %v107 = vunpack.c.l.b16 %v71
    %v108 = vunpack.c.l.b16 %v72
    %v109 = vunpack.c.l.b16 %v73
    %v110 = vunpack.c.l.b16 %v74
    %v111 = vunpack.c.l.b16 %v75
    %v112 = vunpack.c.l.b16 %v76
    %v113 = vunpack.c.l.b16 %v77
    %v114 = vunpack.c.l.b16 %v78
    %v115 = vunpack.c.l.b16 %v79
    %v116 = vunpack.c.l.b16 %v80
    %v117 = vunpack.c.l.b16 %v81
    %v118 = vunpack.c.l.b16 %v82
    %v119 = vunpack.c.l.b16 %v83
    %v120 = vpack.c.b16 %v105, %v104
    %v121 = vpack.c.b16 %v107, %v106
    %v122 = vpack.c.b16 %v109, %v108
    %v123 = vpack.c.b16 %v111, %v110
    %v124 = vpack.c.b16 %v113, %v112
    %v125 = vpack.c.b16 %v115, %v114
    %v126 = vpack.c.b16 %v117, %v116
    %v127 = vpack.c.b16 %v119, %v118
    %v140 = vunpack.c.l.b16 %v56
    %v141 = vunpack.c.l.b16 %v57
    %v142 = vunpack.c.l.b16 %v58
    %v143 = vunpack.c.l.b16 %v59
    %v144 = vunpack.c.l.b16 %v60
    %v145 = vunpack.c.l.b16 %v61
    %v146 = vunpack.c.l.b16 %v62
    %v147 = vunpack.c.l.b16 %v63
    %v148 = vunpack.c.l.b16 %v64
    %v149 = vunpack.c.l.b16 %v65
    %v150 = vunpack.c.l.b16 %v66
    %v151 = vunpack.c.l.b16 %v67
    %v152 = vpack.c.b16 %v141, %v140
    %v153 = vpack.c.b16 %v143, %v142
    %v154 = vpack.c.b16 %v145, %v144
    %v155 = vpack.c.b16 %v147, %v146
    %v156 = vpack.c.b16 %v149, %v148
    %v157 = vpack.c.b16 %v151, %v150
    %vm164 = vcmask 785408
    %v166 = vsel %vm164, %v120, 0
    %v169 = vsel %vm164, %v121, 0
    %v172 = vsel %vm164, %v122, 0
    %v175 = vsel %vm164, %v123, 0
    %v178 = vsel %vm164, %v124, 0
    %v181 = vsel %vm164, %v125, 0
    %v184 = vsel %vm164, %v126, 0
    %v187 = vsel %vm164, %v127, 0
    %189 = vmatprep.subr.bf16.mxu0 0
    %190 = vmatpush1.bf16.msra.mxu0 %v152
    %191 = vmatprep.subr.bf16.mxu0 0
    %192 = vmatpush1.bf16.msra.mxu0 %v153
    %193 = vmatprep.subr.bf16.mxu0 0
    %194 = vmatpush1.bf16.msra.mxu0 %v154
    %195 = vmatprep.subr.bf16.mxu0 0
    %196 = vmatpush1.bf16.msra.mxu0 %v155
    %197 = vmatprep.subr.bf16.mxu0 0
    %198 = vmatpush1.bf16.msra.mxu0 %v156
    %199 = vmatprep.subr.bf16.mxu0 0
    %200 = vmatpush1.bf16.msra.mxu0 %v157
    %201 = vmatprep.subr.bf16.mxu0 0
    %202 = vmatpush1.bf16.msra.mxu0 0
    %203 = vmatprep.subr.bf16.mxu0 0
    %204 = vmatpush1.bf16.msra.mxu0 0
    %205 = vmatprep.subr.bf16.mxu0 0
    %206 = vmatpush1.bf16.msra.mxu0 0
    %207 = vmatprep.subr.bf16.mxu0 0
    %208 = vmatpush1.bf16.msra.mxu0 0
    %209 = vmatprep.subr.bf16.mxu0 0
    %210 = vmatpush1.bf16.msra.mxu0 0
    %211 = vmatprep.subr.bf16.mxu0 0
    %212 = vmatpush1.bf16.msra.mxu0 0
    %213 = vmatprep.subr.bf16.mxu0 0
    %214 = vmatpush1.bf16.msra.mxu0 0
    %215 = vmatprep.subr.bf16.mxu0 0
    %216 = vmatpush1.bf16.msra.mxu0 0
    %217 = vmatprep.subr.bf16.mxu0 0
    %218 = vmatpush1.bf16.msra.mxu0 0
    %219 = vmatprep.subr.bf16.mxu0 0
    %220 = vmatpush1.bf16.msra.mxu0 0
    %221 = vmatprep.mubr.bf16.mxu0 0
    %222 = vmatmul.mubr.bf16.gmra.mrb[0].mxu0 %v166
    %v223 = vpop.f32.mrb[0].mxu0
    %v224 = vadd.f32 %v87, %v223
    %v225 = vpop.f32.mrb[0].mxu0
    %v226 = vpop.f32.mrb[0].mxu0
    %v227 = vadd.f32 %v87, %v226
    %v228 = vpop.f32.mrb[0].mxu0
    %229 = vmatprep.mubr.bf16.mxu0 0
    %230 = vmatmul.mubr.bf16.gmra.mrb[0].mxu0 %v169
    %v231 = vpop.f32.mrb[0].mxu0
    %v232 = vadd.f32 %v87, %v231
    %v233 = vpop.f32.mrb[0].mxu0
    %v234 = vpop.f32.mrb[0].mxu0
    %v235 = vadd.f32 %v87, %v234
    %v236 = vpop.f32.mrb[0].mxu0
    %237 = vmatprep.mubr.bf16.mxu0 0
    %238 = vmatmul.mubr.bf16.gmra.mrb[0].mxu0 %v172
    %v239 = vpop.f32.mrb[0].mxu0
    %v240 = vadd.f32 %v87, %v239
    %v241 = vpop.f32.mrb[0].mxu0
    %v242 = vpop.f32.mrb[0].mxu0
    %v243 = vadd.f32 %v87, %v242
    %v244 = vpop.f32.mrb[0].mxu0
    %245 = vmatprep.mubr.bf16.mxu0 0
    %246 = vmatmul.mubr.bf16.gmra.mrb[0].mxu0 %v175
    %v247 = vpop.f32.mrb[0].mxu0
    %v248 = vadd.f32 %v87, %v247
    %v249 = vpop.f32.mrb[0].mxu0
    %v250 = vpop.f32.mrb[0].mxu0
    %v251 = vadd.f32 %v87, %v250
    %v252 = vpop.f32.mrb[0].mxu0
    %253 = vmatprep.mubr.bf16.mxu0 0
    %254 = vmatmul.mubr.bf16.gmra.mrb[0].mxu0 %v178
    %v255 = vpop.f32.mrb[0].mxu0
    %v256 = vadd.f32 %v87, %v255
    %v257 = vpop.f32.mrb[0].mxu0
    %v258 = vpop.f32.mrb[0].mxu0
    %v259 = vadd.f32 %v87, %v258
    %v260 = vpop.f32.mrb[0].mxu0
    %261 = vmatprep.mubr.bf16.mxu0 0
    %262 = vmatmul.mubr.bf16.gmra.mrb[0].mxu0 %v181
    %v263 = vpop.f32.mrb[0].mxu0
    %v264 = vadd.f32 %v87, %v263
    %v265 = vpop.f32.mrb[0].mxu0
    %v266 = vpop.f32.mrb[0].mxu0
    %v267 = vadd.f32 %v87, %v266
    %v268 = vpop.f32.mrb[0].mxu0
    %269 = vmatprep.mubr.bf16.mxu0 0
    %270 = vmatmul.mubr.bf16.gmra.mrb[0].mxu0 %v184
    %v271 = vpop.f32.mrb[0].mxu0
    %v272 = vadd.f32 %v87, %v271
    %v273 = vpop.f32.mrb[0].mxu0
    %v274 = vpop.f32.mrb[0].mxu0
    %v275 = vadd.f32 %v87, %v274
    %v276 = vpop.f32.mrb[0].mxu0
    %277 = vmatprep.mubr.bf16.mxu0 0
    %278 = vmatmul.mubr.bf16.gmra.mrb[0].mxu0 %v187
    %v279 = vpop.f32.mrb[0].mxu0
    %v280 = vadd.f32 %v87, %v279
    %v281 = vpop.f32.mrb[0].mxu0
    %v282 = vpop.f32.mrb[0].mxu0
    %v283 = vadd.f32 %v87, %v282
    %v284 = vpop.f32.mrb[0].mxu0
    %285 = vdwg.mxu0
    %vm286 = vcmp.gt.f32.partialorder %v224, 0.0
    %vm287 = vcmp.gt.f32.partialorder %v227, 0.0
    %vm288 = vcmp.gt.f32.partialorder %v232, 0.0
    %vm289 = vcmp.gt.f32.partialorder %v235, 0.0
    %vm290 = vcmp.gt.f32.partialorder %v240, 0.0
    %vm291 = vcmp.gt.f32.partialorder %v243, 0.0
    %vm292 = vcmp.gt.f32.partialorder %v248, 0.0
    %vm293 = vcmp.gt.f32.partialorder %v251, 0.0
    %vm294 = vcmp.gt.f32.partialorder %v256, 0.0
    %vm295 = vcmp.gt.f32.partialorder %v259, 0.0
    %vm296 = vcmp.gt.f32.partialorder %v264, 0.0
    %vm297 = vcmp.gt.f32.partialorder %v267, 0.0
    %vm298 = vcmp.gt.f32.partialorder %v272, 0.0
    %vm299 = vcmp.gt.f32.partialorder %v275, 0.0
    %vm300 = vcmp.gt.f32.partialorder %v280, 0.0
    %vm301 = vcmp.gt.f32.partialorder %v283, 0.0
    %v302 = vmul.f32 %v224, 0.01
    %v303 = vmul.f32 %v227, 0.01
    %v304 = vmul.f32 %v232, 0.01
    %v305 = vmul.f32 %v235, 0.01
    %v306 = vmul.f32 %v240, 0.01
    %v307 = vmul.f32 %v243, 0.01
    %v308 = vmul.f32 %v248, 0.01
    %v309 = vmul.f32 %v251, 0.01
    %v310 = vmul.f32 %v256, 0.01
    %v311 = vmul.f32 %v259, 0.01
    %v312 = vmul.f32 %v264, 0.01
    %v313 = vmul.f32 %v267, 0.01
    %v314 = vmul.f32 %v272, 0.01
    %v315 = vmul.f32 %v275, 0.01
    %v316 = vmul.f32 %v280, 0.01
    %v317 = vmul.f32 %v283, 0.01
    %v318 = vsel %vm286, %v224, %v302
    %v319 = vsel %vm287, %v227, %v303
    %v320 = vsel %vm288, %v232, %v304
    %v321 = vsel %vm289, %v235, %v305
    %v322 = vsel %vm290, %v240, %v306
    %v323 = vsel %vm291, %v243, %v307
    %v324 = vsel %vm292, %v248, %v308
    %v325 = vsel %vm293, %v251, %v309
    %v326 = vsel %vm294, %v256, %v310
    %v327 = vsel %vm295, %v259, %v311
    %v328 = vsel %vm296, %v264, %v312
    %v329 = vsel %vm297, %v267, %v313
    %v330 = vsel %vm298, %v272, %v314
    %v331 = vsel %vm299, %v275, %v315
    %v332 = vsel %vm300, %v280, %v316
    %v333 = vsel %vm301, %v283, %v317
    %v334 = vld [vmem:[#allocation5 + $0x30] sm:$0xf]
    %v335 = vld [vmem:[#allocation5 + $0x34] sm:$0xf]
    %v336 = vpack.c.bf16 %v319, %v318
    %v337 = vpack.c.bf16 %v321, %v320
    %v338 = vpack.c.bf16 %v323, %v322
    %v339 = vpack.c.bf16 %v325, %v324
    %v340 = vpack.c.bf16 %v327, %v326
    %v341 = vpack.c.bf16 %v329, %v328
    %v342 = vpack.c.bf16 %v331, %v330
    %v343 = vpack.c.bf16 %v333, %v332
    %v346 = vunpack.c.l.b16 %v334
    %v347 = vunpack.c.l.b16 %v335
    %v348 = vpack.c.b16 %v347, %v346
    %vm350 = vcmask 130048
    %v352 = vsel %vm350, %v336, 0
    %v355 = vsel %vm350, %v337, 0
    %v358 = vsel %vm350, %v338, 0
    %v361 = vsel %vm350, %v339, 0
    %v364 = vsel %vm350, %v340, 0
    %v367 = vsel %vm350, %v341, 0
    %v370 = vsel %vm350, %v342, 0
    %v373 = vsel %vm350, %v343, 0
    %375 = vmatprep.subr.bf16.mxu0 0
    %376 = vmatpush1.bf16.msra.mxu0 %v348
    %377 = vmatprep.subr.bf16.mxu0 0
    %378 = vmatpush1.bf16.msra.mxu0 0
    %379 = vmatprep.subr.bf16.mxu0 0
    %380 = vmatpush1.bf16.msra.mxu0 0
    %381 = vmatprep.subr.bf16.mxu0 0
    %382 = vmatpush1.bf16.msra.mxu0 0
    %383 = vmatprep.subr.bf16.mxu0 0
    %384 = vmatpush1.bf16.msra.mxu0 0
    %385 = vmatprep.subr.bf16.mxu0 0
    %386 = vmatpush1.bf16.msra.mxu0 0
    %387 = vmatprep.subr.bf16.mxu0 0
    %388 = vmatpush1.bf16.msra.mxu0 0
    %389 = vmatprep.subr.bf16.mxu0 0
    %390 = vmatpush1.bf16.msra.mxu0 0
    %391 = vmatprep.subr.bf16.mxu0 0
    %392 = vmatpush1.bf16.msra.mxu0 0
    %393 = vmatprep.subr.bf16.mxu0 0
    %394 = vmatpush1.bf16.msra.mxu0 0
    %395 = vmatprep.subr.bf16.mxu0 0
    %396 = vmatpush1.bf16.msra.mxu0 0
    %397 = vmatprep.subr.bf16.mxu0 0
    %398 = vmatpush1.bf16.msra.mxu0 0
    %399 = vmatprep.subr.bf16.mxu0 0
    %400 = vmatpush1.bf16.msra.mxu0 0
    %401 = vmatprep.subr.bf16.mxu0 0
    %402 = vmatpush1.bf16.msra.mxu0 0
    %403 = vmatprep.subr.bf16.mxu0 0
    %404 = vmatpush1.bf16.msra.mxu0 0
    %405 = vmatprep.subr.bf16.mxu0 0
    %406 = vmatpush1.bf16.msra.mxu0 0
    %407 = vmatprep.mubr.bf16.mxu0 0
    %408 = vmatmul.mubr.bf16.gmra.mrb[0].mxu0 %v352
    %v409 = vpop.f32.mrb[0].mxu0
    %v410 = vadd.f32 0.0, %v409
    %v411 = vpop.f32.mrb[0].mxu0
    %v412 = vpop.f32.mrb[0].mxu0
    %v413 = vadd.f32 0.0, %v412
    %v414 = vpop.f32.mrb[0].mxu0
    %415 = vmatprep.mubr.bf16.mxu0 0
    %416 = vmatmul.mubr.bf16.gmra.mrb[0].mxu0 %v355
    %v417 = vpop.f32.mrb[0].mxu0
    %v418 = vadd.f32 0.0, %v417
    %v419 = vpop.f32.mrb[0].mxu0
    %v420 = vpop.f32.mrb[0].mxu0
    %v421 = vadd.f32 0.0, %v420
    %v422 = vpop.f32.mrb[0].mxu0
    %423 = vmatprep.mubr.bf16.mxu0 0
    %424 = vmatmul.mubr.bf16.gmra.mrb[0].mxu0 %v358
    %v425 = vpop.f32.mrb[0].mxu0
    %v426 = vadd.f32 0.0, %v425
    %v427 = vpop.f32.mrb[0].mxu0
    %v428 = vpop.f32.mrb[0].mxu0
    %v429 = vadd.f32 0.0, %v428
    %v430 = vpop.f32.mrb[0].mxu0
    %431 = vmatprep.mubr.bf16.mxu0 0
    %432 = vmatmul.mubr.bf16.gmra.mrb[0].mxu0 %v361
    %v433 = vpop.f32.mrb[0].mxu0
    %v434 = vadd.f32 0.0, %v433
    %v435 = vpop.f32.mrb[0].mxu0
    %v436 = vpop.f32.mrb[0].mxu0
    %v437 = vadd.f32 0.0, %v436
    %v438 = vpop.f32.mrb[0].mxu0
    %439 = vmatprep.mubr.bf16.mxu0 0
    %440 = vmatmul.mubr.bf16.gmra.mrb[0].mxu0 %v364
    %v441 = vpop.f32.mrb[0].mxu0
    %v442 = vadd.f32 0.0, %v441
    %v443 = vpop.f32.mrb[0].mxu0
    %v444 = vpop.f32.mrb[0].mxu0
    %v445 = vadd.f32 0.0, %v444
    %v446 = vpop.f32.mrb[0].mxu0
    %447 = vmatprep.mubr.bf16.mxu0 0
    %448 = vmatmul.mubr.bf16.gmra.mrb[0].mxu0 %v367
    %v449 = vpop.f32.mrb[0].mxu0
    %v450 = vadd.f32 0.0, %v449
    %v451 = vpop.f32.mrb[0].mxu0
    %v452 = vpop.f32.mrb[0].mxu0
    %v453 = vadd.f32 0.0, %v452
    %v454 = vpop.f32.mrb[0].mxu0
    %455 = vmatprep.mubr.bf16.mxu0 0
    %456 = vmatmul.mubr.bf16.gmra.mrb[0].mxu0 %v370
    %v457 = vpop.f32.mrb[0].mxu0
    %v458 = vadd.f32 0.0, %v457
    %v459 = vpop.f32.mrb[0].mxu0
    %v460 = vpop.f32.mrb[0].mxu0
    %v461 = vadd.f32 0.0, %v460
    %v462 = vpop.f32.mrb[0].mxu0
    %463 = vmatprep.mubr.bf16.mxu0 0
    %464 = vmatmul.mubr.bf16.gmra.mrb[0].mxu0 %v373
    %v465 = vpop.f32.mrb[0].mxu0
    %v466 = vadd.f32 0.0, %v465
    %v467 = vpop.f32.mrb[0].mxu0
    %v468 = vpop.f32.mrb[0].mxu0
    %v469 = vadd.f32 0.0, %v468
    %v470 = vpop.f32.mrb[0].mxu0
    %471 = vdwg.mxu0
    %v472 = vrot.slane %v410, 1
    %v473 = vrot.slane %v413, 1
    %v474 = vrot.slane %v418, 1
    %v475 = vrot.slane %v421, 1
    %v476 = vrot.slane %v426, 1
    %v477 = vrot.slane %v429, 1
    %v478 = vrot.slane %v434, 1
    %v479 = vrot.slane %v437, 1
    %v480 = vrot.slane %v442, 1
    %v481 = vrot.slane %v445, 1
    %v482 = vrot.slane %v450, 1
    %v483 = vrot.slane %v453, 1
    %v484 = vrot.slane %v458, 1
    %v485 = vrot.slane %v461, 1
    %v486 = vrot.slane %v466, 1
    %v487 = vrot.slane %v469, 1
    %v488 = vlaneseq
    %v489 = vshrl.u32 %v488, 7
    %vm490 = vcmp.lt.s32.totalorder %v489, 7
    %v491 = vsel %vm490, %v486, %v487
    %v492 = vsel %vm490, %v485, %v486
    %v493 = vsel %vm490, %v484, %v485
    %v494 = vsel %vm490, %v483, %v484
    %v495 = vsel %vm490, %v482, %v483
    %v496 = vsel %vm490, %v481, %v482
    %v497 = vsel %vm490, %v480, %v481
    %v498 = vsel %vm490, %v479, %v480
    %v499 = vsel %vm490, %v478, %v479
    %v500 = vsel %vm490, %v477, %v478
    %v501 = vsel %vm490, %v476, %v477
    %v502 = vsel %vm490, %v475, %v476
    %v503 = vsel %vm490, %v474, %v475
    %v504 = vsel %vm490, %v473, %v474
    %v505 = vsel %vm490, %v472, %v473
    %v506 = vsel %vm490, %v487, %v472
    %507 = vrot.lane.b32.xlu0 %v505, 112
    %v508 = vpop.permute.xlu0 %507
    %509 = vrot.lane.b32.xlu0 %v504, 112
    %v510 = vpop.permute.xlu0 %509
    %511 = vrot.lane.b32.xlu0 %v503, 112
    %v512 = vpop.permute.xlu0 %511
    %513 = vrot.lane.b32.xlu0 %v502, 112
    %v514 = vpop.permute.xlu0 %513
    %515 = vrot.lane.b32.xlu0 %v501, 112
    %v516 = vpop.permute.xlu0 %515
    %517 = vrot.lane.b32.xlu0 %v500, 112
    %v518 = vpop.permute.xlu0 %517
    %519 = vrot.lane.b32.xlu0 %v499, 112
    %v520 = vpop.permute.xlu0 %519
    %521 = vrot.lane.b32.xlu0 %v498, 112
    %v522 = vpop.permute.xlu0 %521
    %523 = vrot.lane.b32.xlu0 %v497, 112
    %v524 = vpop.permute.xlu0 %523
    %525 = vrot.lane.b32.xlu0 %v496, 112
    %v526 = vpop.permute.xlu0 %525
    %527 = vrot.lane.b32.xlu0 %v495, 112
    %v528 = vpop.permute.xlu0 %527
    %529 = vrot.lane.b32.xlu0 %v494, 112
    %v530 = vpop.permute.xlu0 %529
    %531 = vrot.lane.b32.xlu0 %v493, 112
    %v532 = vpop.permute.xlu0 %531
    %533 = vrot.lane.b32.xlu0 %v492, 112
    %v534 = vpop.permute.xlu0 %533
    %535 = vrot.lane.b32.xlu0 %v491, 112
    %v536 = vpop.permute.xlu0 %535
    %537 = vrot.lane.b32.xlu0 %v506, 112
    %v538 = vpop.permute.xlu0 %537
    %v539 = vadd.f32 %v410, %v508
    %v540 = vadd.f32 %v413, %v510
    %v541 = vadd.f32 %v418, %v512
    %v542 = vadd.f32 %v421, %v514
    %v543 = vadd.f32 %v426, %v516
    %v544 = vadd.f32 %v429, %v518
    %v545 = vadd.f32 %v434, %v520
    %v546 = vadd.f32 %v437, %v522
    %v547 = vadd.f32 %v442, %v524
    %v548 = vadd.f32 %v445, %v526
    %v549 = vadd.f32 %v450, %v528
    %v550 = vadd.f32 %v453, %v530
    %v551 = vadd.f32 %v458, %v532
    %v552 = vadd.f32 %v461, %v534
    %v553 = vadd.f32 %v466, %v536
    %v554 = vadd.f32 %v469, %v538
    %v555 = vrot.slane %v410, 2
    %v556 = vrot.slane %v413, 2
    %v557 = vrot.slane %v418, 2
    %v558 = vrot.slane %v421, 2
    %v559 = vrot.slane %v426, 2
    %v560 = vrot.slane %v429, 2
    %v561 = vrot.slane %v434, 2
    %v562 = vrot.slane %v437, 2
    %v563 = vrot.slane %v442, 2
    %v564 = vrot.slane %v445, 2
    %v565 = vrot.slane %v450, 2
    %v566 = vrot.slane %v453, 2
    %v567 = vrot.slane %v458, 2
    %v568 = vrot.slane %v461, 2
    %v569 = vrot.slane %v466, 2
    %v570 = vrot.slane %v469, 2
    %vm571 = vcmp.lt.s32.totalorder %v489, 6
    %v572 = vsel %vm571, %v569, %v570
    %v573 = vsel %vm571, %v568, %v569
    %v574 = vsel %vm571, %v567, %v568
    %v575 = vsel %vm571, %v566, %v567
    %v576 = vsel %vm571, %v565, %v566
    %v577 = vsel %vm571, %v564, %v565
    %v578 = vsel %vm571, %v563, %v564
    %v579 = vsel %vm571, %v562, %v563
    %v580 = vsel %vm571, %v561, %v562
    %v581 = vsel %vm571, %v560, %v561
    %v582 = vsel %vm571, %v559, %v560
    %v583 = vsel %vm571, %v558, %v559
    %v584 = vsel %vm571, %v557, %v558
    %v585 = vsel %vm571, %v556, %v557
    %v586 = vsel %vm571, %v555, %v556
    %v587 = vsel %vm571, %v570, %v555
    %588 = vrot.lane.b32.xlu0 %v586, 96
    %v589 = vpop.permute.xlu0 %588
    %590 = vrot.lane.b32.xlu0 %v585, 96
    %v591 = vpop.permute.xlu0 %590
    %592 = vrot.lane.b32.xlu0 %v584, 96
    %v593 = vpop.permute.xlu0 %592
    %594 = vrot.lane.b32.xlu0 %v583, 96
    %v595 = vpop.permute.xlu0 %594
    %596 = vrot.lane.b32.xlu0 %v582, 96
    %v597 = vpop.permute.xlu0 %596
    %598 = vrot.lane.b32.xlu0 %v581, 96
    %v599 = vpop.permute.xlu0 %598
    %600 = vrot.lane.b32.xlu0 %v580, 96
    %v601 = vpop.permute.xlu0 %600
    %602 = vrot.lane.b32.xlu0 %v579, 96
    %v603 = vpop.permute.xlu0 %602
    %604 = vrot.lane.b32.xlu0 %v578, 96
    %v605 = vpop.permute.xlu0 %604
    %606 = vrot.lane.b32.xlu0 %v577, 96
    %v607 = vpop.permute.xlu0 %606
    %608 = vrot.lane.b32.xlu0 %v576, 96
    %v609 = vpop.permute.xlu0 %608
    %610 = vrot.lane.b32.xlu0 %v575, 96
    %v611 = vpop.permute.xlu0 %610
    %612 = vrot.lane.b32.xlu0 %v574, 96
    %v613 = vpop.permute.xlu0 %612
    %614 = vrot.lane.b32.xlu0 %v573, 96
    %v615 = vpop.permute.xlu0 %614
    %616 = vrot.lane.b32.xlu0 %v572, 96
    %v617 = vpop.permute.xlu0 %616
    %618 = vrot.lane.b32.xlu0 %v587, 96
    %v619 = vpop.permute.xlu0 %618
    %v620 = vadd.f32 %v539, %v589
    %v621 = vadd.f32 %v540, %v591
    %v622 = vadd.f32 %v541, %v593
    %v623 = vadd.f32 %v542, %v595
    %v624 = vadd.f32 %v543, %v597
    %v625 = vadd.f32 %v544, %v599
    %v626 = vadd.f32 %v545, %v601
    %v627 = vadd.f32 %v546, %v603
    %v628 = vadd.f32 %v547, %v605
    %v629 = vadd.f32 %v548, %v607
    %v630 = vadd.f32 %v549, %v609
    %v631 = vadd.f32 %v550, %v611
    %v632 = vadd.f32 %v551, %v613
    %v633 = vadd.f32 %v552, %v615
    %v634 = vadd.f32 %v553, %v617
    %v635 = vadd.f32 %v554, %v619
    %v636 = vlaneseq
    %v637 = vshrl.u32 %v636, 7
    %v638 = vsub.s32 1, %v637
    %v639 = vrot.slane %v55, %v638
    %v640 = vadd.f32 %v620, %v639
    %v641 = vadd.f32 %v621, %v639
    %v642 = vadd.f32 %v622, %v639
    %v643 = vadd.f32 %v623, %v639
    %v644 = vadd.f32 %v624, %v639
    %v645 = vadd.f32 %v625, %v639
    %v646 = vadd.f32 %v626, %v639
    %v647 = vadd.f32 %v627, %v639
    %v648 = vadd.f32 %v628, %v639
    %v649 = vadd.f32 %v629, %v639
    %v650 = vadd.f32 %v630, %v639
    %v651 = vadd.f32 %v631, %v639
    %v652 = vadd.f32 %v632, %v639
    %v653 = vadd.f32 %v633, %v639
    %v654 = vadd.f32 %v634, %v639
    %v655 = vadd.f32 %v635, %v639
    %vm656 = vcmp.gt.f32.partialorder %v640, 0.0
    %vm657 = vcmp.gt.f32.partialorder %v641, 0.0
    %vm658 = vcmp.gt.f32.partialorder %v642, 0.0
    %vm659 = vcmp.gt.f32.partialorder %v643, 0.0
    %vm660 = vcmp.gt.f32.partialorder %v644, 0.0
    %vm661 = vcmp.gt.f32.partialorder %v645, 0.0
    %vm662 = vcmp.gt.f32.partialorder %v646, 0.0
    %vm663 = vcmp.gt.f32.partialorder %v647, 0.0
    %vm664 = vcmp.gt.f32.partialorder %v648, 0.0
    %vm665 = vcmp.gt.f32.partialorder %v649, 0.0
    %vm666 = vcmp.gt.f32.partialorder %v650, 0.0
    %vm667 = vcmp.gt.f32.partialorder %v651, 0.0
    %vm668 = vcmp.gt.f32.partialorder %v652, 0.0
    %vm669 = vcmp.gt.f32.partialorder %v653, 0.0
    %vm670 = vcmp.gt.f32.partialorder %v654, 0.0
    %vm671 = vcmp.gt.f32.partialorder %v655, 0.0
    %v672 = vmul.f32 %v640, 0.01
    %v673 = vmul.f32 %v641, 0.01
    %v674 = vmul.f32 %v642, 0.01
    %v675 = vmul.f32 %v643, 0.01
    %v676 = vmul.f32 %v644, 0.01
    %v677 = vmul.f32 %v645, 0.01
    %v678 = vmul.f32 %v646, 0.01
    %v679 = vmul.f32 %v647, 0.01
    %v680 = vmul.f32 %v648, 0.01
    %v681 = vmul.f32 %v649, 0.01
    %v682 = vmul.f32 %v650, 0.01
    %v683 = vmul.f32 %v651, 0.01
    %v684 = vmul.f32 %v652, 0.01
    %v685 = vmul.f32 %v653, 0.01
    %v686 = vmul.f32 %v654, 0.01
    %v687 = vmul.f32 %v655, 0.01
    %v688 = vsel %vm656, %v640, %v672
    %v689 = vsel %vm657, %v641, %v673
    %v690 = vsel %vm658, %v642, %v674
    %v691 = vsel %vm659, %v643, %v675
    %v692 = vsel %vm660, %v644, %v676
    %v693 = vsel %vm661, %v645, %v677
    %v694 = vsel %vm662, %v646, %v678
    %v695 = vsel %vm663, %v647, %v679
    %v696 = vsel %vm664, %v648, %v680
    %v697 = vsel %vm665, %v649, %v681
    %v698 = vsel %vm666, %v650, %v682
    %v699 = vsel %vm667, %v651, %v683
    %v700 = vsel %vm668, %v652, %v684
    %v701 = vsel %vm669, %v653, %v685
    %v702 = vsel %vm670, %v654, %v686
    %v703 = vsel %vm671, %v655, %v687
    %v704 = vadd.s32 %v489, 8
    %vm705 = vcmp.le.s32.totalorder %v489, 11
    %vm706 = vcmp.le.s32.totalorder %v704, 11
    %vm707 = vcmp.lt.s32.totalorder %v489, 0
    %v708 = vsub.s32 0, %v489
    %v709 = vsel %vm707, %v708, %v489
    %v710 = vshrl.u32 %v709, 1
    %v711 = vand.u32 %v709, 1
    %v712 = vsub.s32 0, %v711
    %v713 = vsel %vm707, %v712, %v711
    %vm714 = vcmp.lt.s32.totalorder %v704, 0
    %v715 = vsub.s32 0, %v704
    %v716 = vsel %vm714, %v715, %v704
    %v717 = vshrl.u32 %v716, 1
    %v718 = vand.u32 %v716, 1
    %v719 = vsub.s32 0, %v718
    %v720 = vsel %vm714, %v719, %v718
    %vm721 = vcmp.ne.s32.totalorder %v713, 0
    %vm722 = vcmp.ne.s32.totalorder %v720, 0
    %vm723 = vcmp.lt.s32.totalorder %v713, 0
    %vm724 = vcmp.lt.s32.totalorder %v720, 0
    %vm725 = vmand %vm723, %vm721
    %vm726 = vmand %vm724, %vm722
    %v727 = vadd.s32 %v713, 2
    %v728 = vadd.s32 %v720, 2
    %v729 = vsel %vm725, %v727, %v713
    %v730 = vsel %vm726, %v728, %v720
    %vm731 = vcmp.eq.s32.totalorder %v729, 0
    %vm732 = vcmp.eq.s32.totalorder %v730, 0
    %vm733 = vmand %vm705, %vm731
    %vm734 = vmand %vm706, %vm732
    %v735 = vsel %vm733, %v688, -inf
    %v736 = vsel %vm734, %v689, -inf
    %v737 = vsel %vm733, %v690, -inf
    %v738 = vsel %vm734, %v691, -inf
    %v739 = vsel %vm733, %v692, -inf
    %v740 = vsel %vm734, %v693, -inf
    %v741 = vsel %vm733, %v694, -inf
    %v742 = vsel %vm734, %v695, -inf
    %v743 = vsel %vm733, %v696, -inf
    %v744 = vsel %vm734, %v697, -inf
    %v745 = vsel %vm733, %v698, -inf
    %v746 = vsel %vm734, %v699, -inf
    %v747 = vsel %vm733, %v700, -inf
    %v748 = vsel %vm734, %v701, -inf
    %v749 = vsel %vm733, %v702, -inf
    %v750 = vsel %vm734, %v703, -inf
    %v751 = vmax.f32 %v735, %v736
    %v752 = vrot.slane %v751, 4
    %v753 = vmax.f32 %v751, %v752
    %v754 = vrot.slane %v753, 2
    %v755 = vmax.f32 %v753, %v754
    %v756 = vrot.slane %v755, 1
    %v757 = vmax.f32 %v755, %v756
    %v758 = vmax.f32 %v737, %v738
    %v759 = vrot.slane %v758, 4
    %v760 = vmax.f32 %v758, %v759
    %v761 = vrot.slane %v760, 2
    %v762 = vmax.f32 %v760, %v761
    %v763 = vrot.slane %v762, 1
    %v764 = vmax.f32 %v762, %v763
    %v765 = vmax.f32 %v739, %v740
    %v766 = vrot.slane %v765, 4
    %v767 = vmax.f32 %v765, %v766
    %v768 = vrot.slane %v767, 2
    %v769 = vmax.f32 %v767, %v768
    %v770 = vrot.slane %v769, 1
    %v771 = vmax.f32 %v769, %v770
    %v772 = vmax.f32 %v741, %v742
    %v773 = vrot.slane %v772, 4
    %v774 = vmax.f32 %v772, %v773
    %v775 = vrot.slane %v774, 2
    %v776 = vmax.f32 %v774, %v775
    %v777 = vrot.slane %v776, 1
    %v778 = vmax.f32 %v776, %v777
    %v779 = vmax.f32 %v743, %v744
    %v780 = vrot.slane %v779, 4
    %v781 = vmax.f32 %v779, %v780
    %v782 = vrot.slane %v781, 2
    %v783 = vmax.f32 %v781, %v782
    %v784 = vrot.slane %v783, 1
    %v785 = vmax.f32 %v783, %v784
    %v786 = vmax.f32 %v745, %v746
    %v787 = vrot.slane %v786, 4
    %v788 = vmax.f32 %v786, %v787
    %v789 = vrot.slane %v788, 2
    %v790 = vmax.f32 %v788, %v789
    %v791 = vrot.slane %v790, 1
    %v792 = vmax.f32 %v790, %v791
    %v793 = vmax.f32 %v747, %v748
    %v794 = vrot.slane %v793, 4
    %v795 = vmax.f32 %v793, %v794
    %v796 = vrot.slane %v795, 2
    %v797 = vmax.f32 %v795, %v796
    %v798 = vrot.slane %v797, 1
    %v799 = vmax.f32 %v797, %v798
    %v800 = vmax.f32 %v749, %v750
    %v801 = vrot.slane %v800, 4
    %v802 = vmax.f32 %v800, %v801
    %v803 = vrot.slane %v802, 2
    %v804 = vmax.f32 %v802, %v803
    %v805 = vrot.slane %v804, 1
    %v806 = vmax.f32 %v804, %v805
    %v807 = vld [vmem:[#allocation5 + $0x38] sm:$0xf]
    %v808 = vld [vmem:[#allocation5 + $0x3c] sm:$0xf]
    %v809 = vpack.c.bf16 %v757, %v757
    %v810 = vpack.c.bf16 %v764, %v764
    %v811 = vpack.c.bf16 %v771, %v771
    %v812 = vpack.c.bf16 %v778, %v778
    %v813 = vpack.c.bf16 %v785, %v785
    %v814 = vpack.c.bf16 %v792, %v792
    %v815 = vpack.c.bf16 %v799, %v799
    %v816 = vpack.c.bf16 %v806, %v806
    %v817 = vlaneseq
    %v818 = vshrl.u32 %v817, 7
    %v819 = vsub.s32 2, %v818
    %v820 = vrot.slane %v55, %v819
    %v829 = vunpack.c.l.b16 %v809
    %v830 = vunpack.c.l.b16 %v810
    %v831 = vunpack.c.l.b16 %v811
    %v832 = vunpack.c.l.b16 %v812
    %v833 = vunpack.c.l.b16 %v813
    %v834 = vunpack.c.l.b16 %v814
    %v835 = vunpack.c.l.b16 %v815
    %v836 = vunpack.c.l.b16 %v816
    %vm837 = vcmask 1041409
    %v838 = vsel %vm837, %v830, %v829
    %vm839 = vcmask 1042434
    %v840 = vsel %vm839, %v831, %v838
    %vm841 = vcmask 1043459
    %v842 = vsel %vm841, %v832, %v840
    %vm843 = vcmask 1044484
    %v844 = vsel %vm843, %v833, %v842
    %vm845 = vcmask 1045509
    %v846 = vsel %vm845, %v834, %v844
    %vm847 = vcmask 1046534
    %v848 = vsel %vm847, %v835, %v846
    %vm849 = vcmask 1047559
    %v850 = vsel %vm849, %v836, %v848
    %v851 = vpack.c.b16 %v850, %v850
    %v854 = vunpack.c.l.b16 %v807
    %v855 = vunpack.c.l.b16 %v808
    %v856 = vpack.c.b16 %v855, %v854
    %v859 = vsel %vm350, %v851, 0
    %861 = vmatprep.subr.bf16.mxu0 0
    %862 = vmatpush1.bf16.msra.mxu0 %v856
    %863 = vmatprep.subr.bf16.mxu0 0
    %864 = vmatpush1.bf16.msra.mxu0 0
    %865 = vmatprep.subr.bf16.mxu0 0
    %866 = vmatpush1.bf16.msra.mxu0 0
    %867 = vmatprep.subr.bf16.mxu0 0
    %868 = vmatpush1.bf16.msra.mxu0 0
    %869 = vmatprep.subr.bf16.mxu0 0
    %870 = vmatpush1.bf16.msra.mxu0 0
    %871 = vmatprep.subr.bf16.mxu0 0
    %872 = vmatpush1.bf16.msra.mxu0 0
    %873 = vmatprep.subr.bf16.mxu0 0
    %874 = vmatpush1.bf16.msra.mxu0 0
    %875 = vmatprep.subr.bf16.mxu0 0
    %876 = vmatpush1.bf16.msra.mxu0 0
    %877 = vmatprep.subr.bf16.mxu0 0
    %878 = vmatpush1.bf16.msra.mxu0 0
    %879 = vmatprep.subr.bf16.mxu0 0
    %880 = vmatpush1.bf16.msra.mxu0 0
    %881 = vmatprep.subr.bf16.mxu0 0
    %882 = vmatpush1.bf16.msra.mxu0 0
    %883 = vmatprep.subr.bf16.mxu0 0
    %884 = vmatpush1.bf16.msra.mxu0 0
    %885 = vmatprep.subr.bf16.mxu0 0
    %886 = vmatpush1.bf16.msra.mxu0 0
    %887 = vmatprep.subr.bf16.mxu0 0
    %888 = vmatpush1.bf16.msra.mxu0 0
    %889 = vmatprep.subr.bf16.mxu0 0
    %890 = vmatpush1.bf16.msra.mxu0 0
    %891 = vmatprep.subr.bf16.mxu0 0
    %892 = vmatpush1.bf16.msra.mxu0 0
    %893 = vmatprep.mubr.bf16.mxu0 0
    %894 = vmatmul.mubr.bf16.gmra.mrb[0].mxu0 %v859
    %v895 = vpop.f32.mrb[0].mxu0
    %v896 = vadd.f32 %v820, %v895
    %v897 = vpop.f32.mrb[0].mxu0
    %v898 = vpop.f32.mrb[0].mxu0
    %v899 = vpop.f32.mrb[0].mxu0
    %900 = vdwg.mxu0
    %v901 = vtanh.pop %v896
    %v902 = vld [vmem:[#allocation5 + $0x40] sm:$0xf]
    %v903 = vld [vmem:[#allocation5 + $0x44] sm:$0xf]
    %v904 = vld [vmem:[#allocation5 + $0x48] sm:$0xf]
    %v905 = vld [vmem:[#allocation5 + $0x4c] sm:$0xf]
    %v906 = vpack.c.bf16 %v901, %v901
    %v907 = vlaneseq
    %v908 = vshrl.u32 %v907, 7
    %v909 = vsub.s32 3, %v908
    %v910 = vrot.slane %v55, %v909
    %v915 = vunpack.c.l.b16 %v902
    %v916 = vunpack.c.l.b16 %v903
    %v917 = vunpack.c.l.b16 %v904
    %v918 = vunpack.c.l.b16 %v905
    %v919 = vpack.c.b16 %v916, %v915
    %v920 = vpack.c.b16 %v918, %v917
    %vm923 = vcmask 261120
    %v925 = vsel %vm923, %v906, 0
    %927 = vmatprep.subr.bf16.mxu0 0
    %928 = vmatpush1.bf16.msra.mxu0 %v919
    %929 = vmatprep.subr.bf16.mxu0 0
    %930 = vmatpush1.bf16.msra.mxu0 %v920
    %931 = vmatprep.subr.bf16.mxu0 0
    %932 = vmatpush1.bf16.msra.mxu0 0
    %933 = vmatprep.subr.bf16.mxu0 0
    %934 = vmatpush1.bf16.msra.mxu0 0
    %935 = vmatprep.subr.bf16.mxu0 0
    %936 = vmatpush1.bf16.msra.mxu0 0
    %937 = vmatprep.subr.bf16.mxu0 0
    %938 = vmatpush1.bf16.msra.mxu0 0
    %939 = vmatprep.subr.bf16.mxu0 0
    %940 = vmatpush1.bf16.msra.mxu0 0
    %941 = vmatprep.subr.bf16.mxu0 0
    %942 = vmatpush1.bf16.msra.mxu0 0
    %943 = vmatprep.subr.bf16.mxu0 0
    %944 = vmatpush1.bf16.msra.mxu0 0
    %945 = vmatprep.subr.bf16.mxu0 0
    %946 = vmatpush1.bf16.msra.mxu0 0
    %947 = vmatprep.subr.bf16.mxu0 0
    %948 = vmatpush1.bf16.msra.mxu0 0
    %949 = vmatprep.subr.bf16.mxu0 0
    %950 = vmatpush1.bf16.msra.mxu0 0
    %951 = vmatprep.subr.bf16.mxu0 0
    %952 = vmatpush1.bf16.msra.mxu0 0
    %953 = vmatprep.subr.bf16.mxu0 0
    %954 = vmatpush1.bf16.msra.mxu0 0
    %955 = vmatprep.subr.bf16.mxu0 0
    %956 = vmatpush1.bf16.msra.mxu0 0
    %957 = vmatprep.subr.bf16.mxu0 0
    %958 = vmatpush1.bf16.msra.mxu0 0
    %959 = vmatprep.mubr.bf16.mxu0 0
    %960 = vmatmul.mubr.bf16.gmra.mrb[0].mxu0 %v925
    %v961 = vpop.f32.mrb[0].mxu0
    %v962 = vadd.f32 %v910, %v961
    %v963 = vpop.f32.mrb[0].mxu0
    %v964 = vpop.f32.mrb[0].mxu0
    %v965 = vpop.f32.mrb[0].mxu0
    %966 = vdwg.mxu0
    %v967 = vlaneseq
    %v968 = vand.u32 %v967, 127
    %vm969 = vcmp.lt.s32.totalorder %v968, 2
    %v970 = vsel %vm969, %v962, -inf
    %971 = vmax.xlane.f32.xlu0 %v970
    %v972 = vpop.xlane.xlu0 %971
    %v973 = vsub.f32 %v970, %v972
    %v974 = vmul.f32 %v973, 1.442695
    %v975 = vpow.pop %v974
    %976 = vadd.xlane.f32.xlu0 %v975
    %v977 = vpop.xlane.xlu0 %976
    %v978 = vrcp.pop %v977
    %v979 = vmul.f32 %v975, %v978
    %980 = vst [vmem:[#allocation8] sm:$0xff] %v979
    // Predicated region
    $region26: #{tpu_custom_call.1} parent=1 // pred_check
      _
    $region27: #{tpu_custom_call.1} parent=1 // pred_check_branch
      %982 = sbr.rel (0) target = $region29
    $region28: #{tpu_custom_call.1} parent=1 // pred_region
      %s984 = ssub.s32 128, 128
      %985 = vsyncadd [#allocation4], %s984
      %s987 = sshll.u32 [#allocation8], 4
      %s988 = int_to_ptr.vmem [resolvable:$true] %s987
      %990 = dma.vmem_to_hbm [thread:$0]  %s988, 128, %s3, [#allocation4]
    $region29: #{tpu_custom_call.1} parent=1 // pred_fallthru
      _
    // Predicated region
    $region30: #{tpu_custom_call.1} parent=1 // pred_check
      _
    $region31: #{tpu_custom_call.1} parent=1 // pred_check_branch
      %992 = sbr.rel (0) target = $region33
    $region32: #{tpu_custom_call.1} parent=1 // pred_region
      %993 = dma.done [#allocation4], 128
    $region33: #{tpu_custom_call.1} parent=1 // pred_fallthru
      _
    %994 = vsyncpa [#allocation3], 1
    %995 = vsyncpa [#allocation6], 1
    %996 = vsyncpa [#allocation4], 1

</llo_original>
